<compile_context>
chip_gen: v7x
topology: tpu7x:2x2x1
jax: 0.10.0
libtpu: 0.0.40
codegen_flags: <defaults>
</compile_context>

<pallas_src>
import jax
import jax.numpy as jnp
from jax.experimental import pallas as pl
from jax.experimental.pallas import tpu as pltpu


def _round_up(x, m):
    return ((x + m - 1) // m) * m


def _latent_encoder_kernel(hid_ref, y_ref, w_ref, b_ref, e_ref, gsum_ref, out_ref):
    # Streamed per-row operands.
    h = hid_ref[...].astype(jnp.float32)          # [tb, F]
    y = y_ref[...].astype(jnp.float32)            # [tb, n_y]
    # Weights may be stored bf16 (HBM/VMEM savings already banked); upcast in
    # VMEM and keep f32 accumulation.
    w = w_ref[...].astype(jnp.float32)            # [F, nyl]

    # One fused MXU pass over ALL clusters: lg[i, j*2nz + k] = h[i] . W[j,k,:].
    lg = jnp.dot(h, w, preferred_element_type=jnp.float32)                 # [tb, nyl]

    # In-kernel expansion of y (replaces the old streamed y_exp):
    # yexp[i, j*2nz + k] == y[i, j]  via a tiny constant 0/1 matmul.
    yexp = jnp.dot(y, e_ref[...], preferred_element_type=jnp.float32)      # [tb, nyl]

    # Sum over the cluster axis via a constant 0/1 group-sum matrix, then fold
    # the bias in as y @ biases (2nz lanes instead of nyl lanes).
    logits = jnp.dot(yexp * lg, gsum_ref[...],
                     preferred_element_type=jnp.float32)                   # [tb, 2nz]
    logits = logits + jnp.dot(y, b_ref[...], preferred_element_type=jnp.float32)

    # Epilogue: mu on lanes [:n_z], sigma = sqrt(softplus(.)) on lanes [n_z:].
    # Per-lane select (VPU) + softplus/sqrt (EUP) -- no lane shifts; single
    # lane-dense [tb, 2*n_z] store (2nz < 128 lanes, padding would only add
    # HBM bytes, see review note).
    n_z = out_ref.shape[-1] // 2
    lane = jax.lax.broadcasted_iota(jnp.int32, logits.shape, 1)
    sigma = jnp.sqrt(jax.nn.softplus(logits))
    out_ref[...] = jnp.where(lane < n_z, logits, sigma).astype(out_ref.dtype)


def prepare_latent_encoder_params(weights, biases, param_dtype=None):
    """One-time parameter layout prep -- keep this OUT of the per-step hot path.

    Args:
      weights: [n_y, 2*n_z, feature_size] (stacked PyTorch nn.Linear layout)
      biases:  [n_y, 2*n_z]
      param_dtype: optional storage/streaming dtype for the fused weights
        (e.g. jnp.bfloat16 halves weight HBM traffic; accumulation stays f32).

    Returns a dict of fused/constant operands for latent_encoder_apply.
    """
    n_y, n_logits, feature_size = weights.shape
    nyl = n_y * n_logits

    # W_all[f, j*2nz + k] = weights[j, k, f]  -> contraction on hiddens' last axis.
    w_all = jnp.transpose(weights, (2, 0, 1)).reshape(feature_size, nyl)
    if param_dtype is not None:
        w_all = w_all.astype(param_dtype)
    b2 = biases.astype(jnp.float32)                                  # [n_y, 2nz]

    cols = jnp.arange(nyl, dtype=jnp.int32)
    # expand[j, j*2nz + k] = 1  ->  (y @ expand)[i, j*2nz + k] == y[i, j]
    expand = (cols[None, :] // n_logits
              == jnp.arange(n_y, dtype=jnp.int32)[:, None]).astype(jnp.float32)
    # gsum[c, k] = 1 iff c % 2nz == k  -> sums the weighted logits over clusters.
    gsum = (cols[:, None] % n_logits
            == jnp.arange(n_logits, dtype=jnp.int32)[None, :]).astype(jnp.float32)

    return {"w_all": w_all, "b2": b2, "expand": expand, "gsum": gsum}


def latent_encoder_apply(hiddens, y, params):
    """Hot-path forward: q(z | x, y) parameters from pre-fused params.

    Args:
      hiddens: [B, feature_size]
      y:       [B, n_y]
      params:  output of prepare_latent_encoder_params

    Returns:
      (mu, sigma): each [B, n_z]
    """
    w_all, b2 = params["w_all"], params["b2"]
    expand, gsum = params["expand"], params["gsum"]

    B, F = hiddens.shape
    n_y, n_logits = b2.shape
    nyl = n_y * n_logits
    n_z = n_logits // 2

    # ---- batch tiling: ~512-row tiles, pad B up, cdiv grid ("parallel"). ----
    TB = 512
    tb = _round_up(B, 8) if B <= TB else TB
    nb = pl.cdiv(B, tb)
    b_pad = nb * tb
    if b_pad != B:
        hiddens_p = jnp.pad(hiddens, ((0, b_pad - B), (0, 0)))
        y_p = jnp.pad(y, ((0, b_pad - B), (0, 0)))
    else:
        hiddens_p, y_p = hiddens, y

    act_itm = jnp.dtype(hiddens.dtype).itemsize
    w_itm = jnp.dtype(w_all.dtype).itemsize

    # ---- VMEM budget: double-buffered streamed tiles + resident constants
    #      + in-kernel [tb, nyl] intermediates, with 2x headroom, capped so the
    #      same shape also fits v7x's 64 MiB VMEM. ----
    est = (2 * tb * (F * act_itm + n_y * 4 + n_logits * act_itm)
           + 2 * (F * nyl * w_itm + (n_y * n_logits + n_y * nyl + nyl * n_logits) * 4)
           + 2 * tb * nyl * 4)
    vmem_limit = int(min(64 * 1024 * 1024, max(16 * 1024 * 1024, 2 * est)))

    cost = pl.CostEstimate(
        flops=2 * b_pad * (F * nyl + n_y * nyl + nyl * n_logits + n_y * n_logits),
        transcendentals=b_pad * n_logits,
        bytes_accessed=(b_pad * (F * act_itm + n_y * 4 + n_logits * act_itm)
                        + F * nyl * w_itm
                        + (n_y * n_logits + n_y * nyl + nyl * n_logits) * 4),
    )

    out = pl.pallas_call(
        _latent_encoder_kernel,
        out_shape=jax.ShapeDtypeStruct((b_pad, n_logits), hiddens.dtype),
        grid_spec=pltpu.PrefetchScalarGridSpec(
            num_scalar_prefetch=0,
            grid=(nb,),
            in_specs=[
                pl.BlockSpec((tb, F), lambda i: (i, 0)),           # hiddens tile (streamed)
                pl.BlockSpec((tb, n_y), lambda i: (i, 0)),         # raw y tile  (streamed)
                pl.BlockSpec((F, nyl), lambda i: (0, 0)),          # fused weights (resident)
                pl.BlockSpec((n_y, n_logits), lambda i: (0, 0)),   # biases        (resident)
                pl.BlockSpec((n_y, nyl), lambda i: (0, 0)),        # expand matrix (resident)
                pl.BlockSpec((nyl, n_logits), lambda i: (0, 0)),   # group-sum     (resident)
            ],
            out_specs=pl.BlockSpec((tb, n_logits), lambda i: (i, 0)),
        ),
        compiler_params=pltpu.CompilerParams(
            dimension_semantics=("parallel",),
            vmem_limit_bytes=vmem_limit,
        ),
        cost_estimate=cost,
    )(hiddens_p, y_p, w_all, b2, expand, gsum)

    out = out[:B]
    # Free split outside the kernel (kernel writes one lane-dense slab).
    return out[:, :n_z], out[:, n_z:]


def latent_encoder(hiddens, y, weights, biases, param_dtype=None):
    """Module-equivalent convenience wrapper (prep + apply). Prefer calling
    prepare_latent_encoder_params once and latent_encoder_apply in the hot path
    so weights are not re-laid-out on every invocation."""
    return latent_encoder_apply(
        hiddens, y, prepare_latent_encoder_params(weights, biases, param_dtype))


def _reference(hiddens, y, weights, biases):
    # all_logits[j] = hiddens @ W_j.T + b_j        -> [n_y, B, 2*n_z]
    all_logits = jnp.einsum("bf,jkf->jbk", hiddens, weights) + biases[:, None, :]
    # logits[i, k] = sum_j y[i, j] * all_logits[j, i, k]
    logits = jnp.einsum("ij,jik->ik", y, all_logits)
    n_z = logits.shape[-1] // 2
    mu = logits[:, :n_z]
    sigma = jnp.sqrt(jax.nn.softplus(logits[:, n_z:]))
    return mu, sigma


if __name__ == "__main__":
    # Small synthetic shapes consistent with the module.
    B = 8            # batch
    feature_size = 32
    n_y = 6          # number of clusters
    n_z = 16         # latent dim -> n_logits = 32

    key = jax.random.PRNGKey(0)
    k_h, k_y, k_w, k_b = jax.random.split(key, 4)

    hiddens = jax.random.normal(k_h, (B, feature_size), dtype=jnp.float32)
    # y: soft categorical assignment over n_y clusters (rows sum to 1).
    y = jax.nn.softmax(jax.random.normal(k_y, (B, n_y), dtype=jnp.float32), axis=-1)

    # Deterministic parameter init mimicking nn.Linear default (+-1/sqrt(fan_in)).
    bound = 1.0 / jnp.sqrt(jnp.float32(feature_size))
    weights = jax.random.uniform(
        k_w, (n_y, 2 * n_z, feature_size), minval=-bound, maxval=bound, dtype=jnp.float32
    )
    biases = jax.random.uniform(
        k_b, (n_y, 2 * n_z), minval=-bound, maxval=bound, dtype=jnp.float32
    )

    mu_ref, sigma_ref = _reference(hiddens, y, weights, biases)

    # --- f32 parameters (tight check) ---------------------------------------
    params_f32 = prepare_latent_encoder_params(weights, biases)  # one-time layout prep
    mu, sigma = latent_encoder_apply(hiddens, y, params_f32)
    jax.block_until_ready((mu, sigma))
    assert jnp.allclose(mu, mu_ref, atol=1e-4, rtol=1e-4)
    assert jnp.allclose(sigma, sigma_ref, atol=1e-4, rtol=1e-4)

    # --- non-multiple-of-8 batch exercises the pad-and-slice path -----------
    B2 = 20
    hiddens2 = jax.random.normal(jax.random.PRNGKey(1), (B2, feature_size), dtype=jnp.float32)
    y2 = jax.nn.softmax(
        jax.random.normal(jax.random.PRNGKey(2), (B2, n_y), dtype=jnp.float32), axis=-1)
    mu2, sigma2 = latent_encoder_apply(hiddens2, y2, params_f32)
    jax.block_until_ready((mu2, sigma2))
    mu2_ref, sigma2_ref = _reference(hiddens2, y2, weights, biases)
    assert jnp.allclose(mu2, mu2_ref, atol=1e-4, rtol=1e-4)
    assert jnp.allclose(sigma2, sigma2_ref, atol=1e-4, rtol=1e-4)

    # --- bf16-streamed weights (halves weight HBM traffic; looser tolerance) -
    params_bf16 = prepare_latent_encoder_params(weights, biases, param_dtype=jnp.bfloat16)
    mu_b, sigma_b = latent_encoder_apply(hiddens, y, params_bf16)
    jax.block_until_ready((mu_b, sigma_b))
    assert jnp.allclose(mu_b, mu_ref, atol=3e-2, rtol=3e-2)
    assert jnp.allclose(sigma_b, sigma_ref, atol=3e-2, rtol=3e-2)

    print("KERNEL_OK")
</pallas_src>

<mosaic_0001>
module attributes {stable_mosaic.version = 11 : i64} {
  func.func @_latent_encoder_kernel(%arg0: i32, %arg1: memref<8x32xf32, #tpu.memory_space<vmem>>, %arg2: memref<8x6xf32, #tpu.memory_space<vmem>>, %arg3: memref<32x192xf32, #tpu.memory_space<vmem>>, %arg4: memref<6x32xf32, #tpu.memory_space<vmem>>, %arg5: memref<6x192xf32, #tpu.memory_space<vmem>>, %arg6: memref<192x32xf32, #tpu.memory_space<vmem>>, %arg7: memref<8x32xf32, #tpu.memory_space<vmem>>) attributes {dimension_semantics = [#tpu.dimension_semantics<parallel>], iteration_bounds = array<i64: 1>, scalar_prefetch = 0 : i64, scratch_operands = 0 : i64, tpu.core_type = #tpu.core_type<tc>, window_params = [{transform_indices = @transform_0, window_bounds = array<i64: 8, 32>}, {transform_indices = @transform_1, window_bounds = array<i64: 8, 6>}, {pipeline_mode = #tpu.pipeline_mode<synchronous>, transform_indices = @transform_2, window_bounds = array<i64: 32, 192>}, {pipeline_mode = #tpu.pipeline_mode<synchronous>, transform_indices = @transform_3, window_bounds = array<i64: 6, 32>}, {pipeline_mode = #tpu.pipeline_mode<synchronous>, transform_indices = @transform_4, window_bounds = array<i64: 6, 192>}, {pipeline_mode = #tpu.pipeline_mode<synchronous>, transform_indices = @transform_5, window_bounds = array<i64: 192, 32>}, {transform_indices = @transform_6, window_bounds = array<i64: 8, 32>}]} {
    %c0 = arith.constant 0 : index
    %c0_0 = arith.constant 0 : index
    %0 = vector.load %arg1[%c0, %c0_0] : memref<8x32xf32, #tpu.memory_space<vmem>>, vector<8x32xf32>
    %c0_1 = arith.constant 0 : index
    %c0_2 = arith.constant 0 : index
    %1 = vector.load %arg2[%c0_1, %c0_2] : memref<8x6xf32, #tpu.memory_space<vmem>>, vector<8x6xf32>
    %c0_3 = arith.constant 0 : index
    %c0_4 = arith.constant 0 : index
    %2 = vector.load %arg3[%c0_3, %c0_4] : memref<32x192xf32, #tpu.memory_space<vmem>>, vector<32x192xf32>
    %cst = arith.constant dense<0.000000e+00> : vector<8x192xf32>
    %3 = tpu.matmul %0, %2, %cst {dimension_numbers = #tpu.dot_dimension_numbers<[1], [0], [0], [1], [0, 0, 1, 1], [], []>} : vector<8x32xf32>, vector<32x192xf32>, vector<8x192xf32> -> vector<8x192xf32>
    %c0_5 = arith.constant 0 : index
    %c0_6 = arith.constant 0 : index
    %4 = vector.load %arg5[%c0_5, %c0_6] : memref<6x192xf32, #tpu.memory_space<vmem>>, vector<6x192xf32>
    %cst_7 = arith.constant dense<0.000000e+00> : vector<8x192xf32>
    %5 = tpu.matmul %1, %4, %cst_7 {dimension_numbers = #tpu.dot_dimension_numbers<[1], [0], [0], [1], [0, 0, 1, 1], [], []>} : vector<8x6xf32>, vector<6x192xf32>, vector<8x192xf32> -> vector<8x192xf32>
    %6 = arith.mulf %5, %3 : vector<8x192xf32>
    %c0_8 = arith.constant 0 : index
    %c0_9 = arith.constant 0 : index
    %7 = vector.load %arg6[%c0_8, %c0_9] : memref<192x32xf32, #tpu.memory_space<vmem>>, vector<192x32xf32>
    %cst_10 = arith.constant dense<0.000000e+00> : vector<8x32xf32>
    %8 = tpu.matmul %6, %7, %cst_10 {dimension_numbers = #tpu.dot_dimension_numbers<[1], [0], [0], [1], [0, 0, 1, 1], [], []>} : vector<8x192xf32>, vector<192x32xf32>, vector<8x32xf32> -> vector<8x32xf32>
    %c0_11 = arith.constant 0 : index
    %c0_12 = arith.constant 0 : index
    %9 = vector.load %arg4[%c0_11, %c0_12] : memref<6x32xf32, #tpu.memory_space<vmem>>, vector<6x32xf32>
    %cst_13 = arith.constant dense<0.000000e+00> : vector<8x32xf32>
    %10 = tpu.matmul %1, %9, %cst_13 {dimension_numbers = #tpu.dot_dimension_numbers<[1], [0], [0], [1], [0, 0, 1, 1], [], []>} : vector<8x6xf32>, vector<6x32xf32>, vector<8x32xf32> -> vector<8x32xf32>
    %11 = arith.addf %8, %10 : vector<8x32xf32>
    %12 = tpu.iota {dimensions = array<i32: 1>} : vector<8x32xi32>
    %cst_14 = arith.constant 0.000000e+00 : f32
    %13 = vector.broadcast %cst_14 : f32 to vector<8x32xf32>
    %14 = arith.maximumf %11, %13 : vector<8x32xf32>
    %15 = vector.broadcast %cst_14 : f32 to vector<8x32xf32>
    %16 = arith.subf %11, %15 : vector<8x32xf32>
    %17 = arith.cmpf one, %16, %16 : vector<8x32xf32>
    %18 = vector.broadcast %cst_14 : f32 to vector<8x32xf32>
    %19 = arith.addf %11, %18 : vector<8x32xf32>
    %20 = math.absf %16 : vector<8x32xf32>
    %cst_15 = arith.constant 0.000000e+00 : f32
    %21 = vector.broadcast %cst_15 : f32 to vector<8x32xf32>
    %22 = arith.subf %21, %20 : vector<8x32xf32>
    %23 = math.exp %22 : vector<8x32xf32>
    %24 = math.log1p %23 : vector<8x32xf32>
    %25 = arith.addf %14, %24 : vector<8x32xf32>
    %26 = arith.select %17, %19, %25 : vector<8x32xi1>, vector<8x32xf32>
    %27 = math.sqrt %26 : vector<8x32xf32>
    %c16_i32 = arith.constant 16 : i32
    %28 = vector.broadcast %c16_i32 : i32 to vector<8x32xi32>
    %29 = arith.cmpi slt, %12, %28 : vector<8x32xi32>
    %30 = arith.select %29, %11, %27 : vector<8x32xi1>, vector<8x32xf32>
    %c0_16 = arith.constant 0 : index
    %c0_17 = arith.constant 0 : index
    %31 = vector.load %arg7[%c0_16, %c0_17] : memref<8x32xf32, #tpu.memory_space<vmem>>, vector<8x32xf32>
    tpu.vector_store %arg7[%c0_16, %c0_17], %30 {strides = array<i32>} : memref<8x32xf32, #tpu.memory_space<vmem>>, vector<8x32xf32>,
    return
  }
  func.func @transform_0(%arg0: i32) -> (i32, i32) {
    %c0_i32 = arith.constant 0 : i32
    %c0_i32_0 = arith.constant 0 : i32
    return %arg0, %c0_i32 : i32, i32
  }
  func.func @transform_1(%arg0: i32) -> (i32, i32) {
    %c0_i32 = arith.constant 0 : i32
    %c0_i32_0 = arith.constant 0 : i32
    return %arg0, %c0_i32 : i32, i32
  }
  func.func @transform_2(%arg0: i32) -> (i32, i32) {
    %c0_i32 = arith.constant 0 : i32
    %c0_i32_0 = arith.constant 0 : i32
    %c0_i32_1 = arith.constant 0 : i32
    return %c0_i32, %c0_i32_0 : i32, i32
  }
  func.func @transform_3(%arg0: i32) -> (i32, i32) {
    %c0_i32 = arith.constant 0 : i32
    %c0_i32_0 = arith.constant 0 : i32
    %c0_i32_1 = arith.constant 0 : i32
    return %c0_i32, %c0_i32_0 : i32, i32
  }
  func.func @transform_4(%arg0: i32) -> (i32, i32) {
    %c0_i32 = arith.constant 0 : i32
    %c0_i32_0 = arith.constant 0 : i32
    %c0_i32_1 = arith.constant 0 : i32
    return %c0_i32, %c0_i32_0 : i32, i32
  }
  func.func @transform_5(%arg0: i32) -> (i32, i32) {
    %c0_i32 = arith.constant 0 : i32
    %c0_i32_0 = arith.constant 0 : i32
    %c0_i32_1 = arith.constant 0 : i32
    return %c0_i32, %c0_i32_0 : i32, i32
  }
  func.func @transform_6(%arg0: i32) -> (i32, i32) {
    %c0_i32 = arith.constant 0 : i32
    %c0_i32_0 = arith.constant 0 : i32
    return %arg0, %c0_i32 : i32, i32
  }
}

</mosaic_0001>

<llo_original>
// kernel: tpu_custom_call.1
$region0: #{tpu_custom_call.1}
  #allocation0 [shape = 'u32[]', space=smem, size = 0x4, offset = 0x4, fixed_abs, tag = 'smem constant byte address 0x4 - core index']
  #allocation1 [shape = 'u32[144,128]{1,0:T(1,128)}', space=vmem, size = 0x12000, scoped, tag = 'internal scratch']
  %s0 = inlined_call_operand.vmem [shape: f32[8,32], index: 0, kind: input, shape index: {}]
  %s1 = inlined_call_operand.vmem [shape: f32[8,6], index: 1, kind: input, shape index: {}]
  %s2 = inlined_call_operand.vmem [shape: f32[32,192], index: 2, kind: input, shape index: {}]
  %s3 = inlined_call_operand.vmem [shape: f32[6,32], index: 3, kind: input, shape index: {}]
  %s4 = inlined_call_operand.vmem [shape: f32[6,192], index: 4, kind: input, shape index: {}]
  %s5 = inlined_call_operand.vmem [shape: f32[192,32], index: 5, kind: input, shape index: {}]
  %s6 = inlined_call_operand.hbm [shape: f32[8,32], index: 6, kind: output, shape index: {}]
  %s7 = sld [smem:[#allocation0]]
  $region34: #{tpu_custom_call.1} parent=0
    _
  %s9 = ssub.s32 1, %s7
  %s10 = scalar_select 0, %s9, %s7
  $region1: #{tpu_custom_call.1} parent=0
    #allocation2 [shape = 'u8[4096]{0}', space=vmem, size = 0x1000, scoped, tag = 'output window, operand 0, single buffered']
    #allocation3 [shape = 's32[1]{0}', space=sflag, size = 0x4, scoped, tag = 'scoped memory for tpu_custom_call.1']
    %11 = vsyncpa [#allocation3], 0
    // Predicated region
    $region2: #{tpu_custom_call.1} parent=1 // pred_check
      _
    $region3: #{tpu_custom_call.1} parent=1 // pred_check_branch
      %13 = sbr.rel (0) target = $region5
    $region4: #{tpu_custom_call.1} parent=1 // pred_region
      _
    $region5: #{tpu_custom_call.1} parent=1 // pred_fallthru
      _
    // Predicated region
    $region6: #{tpu_custom_call.1} parent=1 // pred_check
      _
    $region7: #{tpu_custom_call.1} parent=1 // pred_check_branch
      %15 = sbr.rel (0) target = $region9
    $region8: #{tpu_custom_call.1} parent=1 // pred_region
      _
    $region9: #{tpu_custom_call.1} parent=1 // pred_fallthru
      _
    // Predicated region
    $region10: #{tpu_custom_call.1} parent=1 // pred_check
      _
    $region11: #{tpu_custom_call.1} parent=1 // pred_check_branch
      %17 = sbr.rel (0) target = $region13
    $region12: #{tpu_custom_call.1} parent=1 // pred_region
      _
    $region13: #{tpu_custom_call.1} parent=1 // pred_fallthru
      _
    // Predicated region
    $region14: #{tpu_custom_call.1} parent=1 // pred_check
      _
    $region15: #{tpu_custom_call.1} parent=1 // pred_check_branch
      %19 = sbr.rel (0) target = $region17
    $region16: #{tpu_custom_call.1} parent=1 // pred_region
      _
    $region17: #{tpu_custom_call.1} parent=1 // pred_fallthru
      _
    // Predicated region
    $region18: #{tpu_custom_call.1} parent=1 // pred_check
      _
    $region19: #{tpu_custom_call.1} parent=1 // pred_check_branch
      %21 = sbr.rel (0) target = $region21
    $region20: #{tpu_custom_call.1} parent=1 // pred_region
      _
    $region21: #{tpu_custom_call.1} parent=1 // pred_fallthru
      _
    // Predicated region
    $region22: #{tpu_custom_call.1} parent=1 // pred_check
      _
    $region23: #{tpu_custom_call.1} parent=1 // pred_check_branch
      %23 = sbr.rel (0) target = $region25
    $region24: #{tpu_custom_call.1} parent=1 // pred_region
      _
    $region25: #{tpu_custom_call.1} parent=1 // pred_fallthru
      _
    %v24 = vld [vmem:[%s0] sm:$0xff]
    %v25 = vld [vmem:[%s1] sm:$0xff]
    %v26 = vld [vmem:[%s2] sm:$0xff]
    %v27 = vld [vmem:[%s2 + $0x8] sm:$0xff]
    %v28 = vld [vmem:[%s2 + $0x10] sm:$0xff]
    %v29 = vld [vmem:[%s2 + $0x18] sm:$0xff]
    %v30 = vld [vmem:[%s2 + $0x20] sm:$0xff]
    %v31 = vld [vmem:[%s2 + $0x28] sm:$0xff]
    %v32 = vld [vmem:[%s2 + $0x30] sm:$0xff]
    %v33 = vld [vmem:[%s2 + $0x38] sm:$0xff]
    %vm34 = vcmask 261120
    %v36 = vsel %vm34, %v24, 0
    %38 = vmatprep.subr.mxu0 %v27
    %39 = vmatpush1.msra.mxu0 %v26
    %40 = vmatprep.subr.mxu0 %v29
    %41 = vmatpush1.msra.mxu0 %v28
    %42 = vmatprep.subr.mxu0 %v31
    %43 = vmatpush1.msra.mxu0 %v30
    %44 = vmatprep.subr.mxu0 %v33
    %45 = vmatpush1.msra.mxu0 %v32
    %46 = vmatprep.subr.mxu0 0.0
    %47 = vmatpush1.msra.mxu0 0.0
    %48 = vmatprep.subr.mxu0 0.0
    %49 = vmatpush1.msra.mxu0 0.0
    %50 = vmatprep.subr.mxu0 0.0
    %51 = vmatpush1.msra.mxu0 0.0
    %52 = vmatprep.subr.mxu0 0.0
    %53 = vmatpush1.msra.mxu0 0.0
    %54 = vmatprep.subr.mxu0 0.0
    %55 = vmatpush1.msra.mxu0 0.0
    %56 = vmatprep.subr.mxu0 0.0
    %57 = vmatpush1.msra.mxu0 0.0
    %58 = vmatprep.subr.mxu0 0.0
    %59 = vmatpush1.msra.mxu0 0.0
    %60 = vmatprep.subr.mxu0 0.0
    %61 = vmatpush1.msra.mxu0 0.0
    %62 = vmatprep.subr.mxu0 0.0
    %63 = vmatpush1.msra.mxu0 0.0
    %64 = vmatprep.subr.mxu0 0.0
    %65 = vmatpush1.msra.mxu0 0.0
    %66 = vmatprep.subr.mxu0 0.0
    %67 = vmatpush1.msra.mxu0 0.0
    %68 = vmatprep.subr.mxu0 0.0
    %69 = vmatpush1.msra.mxu0 0.0
    %70 = vmatprep.subr.mxu0 0.0
    %71 = vmatpush1.msra.mxu0 0.0
    %72 = vmatprep.subr.mxu0 0.0
    %73 = vmatpush1.msra.mxu0 0.0
    %74 = vmatprep.subr.mxu0 0.0
    %75 = vmatpush1.msra.mxu0 0.0
    %76 = vmatprep.subr.mxu0 0.0
    %77 = vmatpush1.msra.mxu0 0.0
    %78 = vmatprep.subr.mxu0 0.0
    %79 = vmatpush1.msra.mxu0 0.0
    %80 = vmatprep.subr.mxu0 0.0
    %81 = vmatpush1.msra.mxu0 0.0
    %82 = vmatprep.subr.mxu0 0.0
    %83 = vmatpush1.msra.mxu0 0.0
    %84 = vmatprep.subr.mxu0 0.0
    %85 = vmatpush1.msra.mxu0 0.0
    %86 = vmatprep.subr.mxu0 0.0
    %87 = vmatpush1.msra.mxu0 0.0
    %88 = vmatprep.subr.mxu0 0.0
    %89 = vmatpush1.msra.mxu0 0.0
    %90 = vmatprep.subr.mxu0 0.0
    %91 = vmatpush1.msra.mxu0 0.0
    %92 = vmatprep.subr.mxu0 0.0
    %93 = vmatpush1.msra.mxu0 0.0
    %94 = vmatprep.subr.mxu0 0.0
    %95 = vmatpush1.msra.mxu0 0.0
    %96 = vmatprep.subr.mxu0 0.0
    %97 = vmatpush1.msra.mxu0 0.0
    %98 = vmatprep.subr.mxu0 0.0
    %99 = vmatpush1.msra.mxu0 0.0
    %100 = vmatprep.subr.mxu0 0.0
    %101 = vmatpush1.msra.mxu0 0.0
    %102 = vmatprep.mubr.f32.mxu0 0.0
    %103 = vmatmul.mubr.f32.gmra.mrb[0].mxu0 %v36
    %v104 = vpop.f32.mrb[0].mxu0
    %v105 = vadd.f32 0.0, %v104
    %v106 = vpop.f32.mrb[0].mxu0
    %v107 = vadd.f32 0.0, %v106
    %108 = vdwg.mxu0
    %v109 = vld [vmem:[%s4] sm:$0x3f]
    %v110 = vld [vmem:[%s4 + $0x8] sm:$0x3f]
    %vm111 = vcmask 48128
    %v113 = vsel %vm111, %v25, 0
    %vm115 = vcmask 1045504
    %v117 = vsel %vm115, %v109, 0
    %v120 = vsel %vm115, %v110, 0
    %122 = vmatprep.subr.mxu0 %v120
    %123 = vmatpush1.msra.mxu0 %v117
    %124 = vmatprep.subr.mxu0 0.0
    %125 = vmatpush1.msra.mxu0 0.0
    %126 = vmatprep.subr.mxu0 0.0
    %127 = vmatpush1.msra.mxu0 0.0
    %128 = vmatprep.subr.mxu0 0.0
    %129 = vmatpush1.msra.mxu0 0.0
    %130 = vmatprep.subr.mxu0 0.0
    %131 = vmatpush1.msra.mxu0 0.0
    %132 = vmatprep.subr.mxu0 0.0
    %133 = vmatpush1.msra.mxu0 0.0
    %134 = vmatprep.subr.mxu0 0.0
    %135 = vmatpush1.msra.mxu0 0.0
    %136 = vmatprep.subr.mxu0 0.0
    %137 = vmatpush1.msra.mxu0 0.0
    %138 = vmatprep.subr.mxu0 0.0
    %139 = vmatpush1.msra.mxu0 0.0
    %140 = vmatprep.subr.mxu0 0.0
    %141 = vmatpush1.msra.mxu0 0.0
    %142 = vmatprep.subr.mxu0 0.0
    %143 = vmatpush1.msra.mxu0 0.0
    %144 = vmatprep.subr.mxu0 0.0
    %145 = vmatpush1.msra.mxu0 0.0
    %146 = vmatprep.subr.mxu0 0.0
    %147 = vmatpush1.msra.mxu0 0.0
    %148 = vmatprep.subr.mxu0 0.0
    %149 = vmatpush1.msra.mxu0 0.0
    %150 = vmatprep.subr.mxu0 0.0
    %151 = vmatpush1.msra.mxu0 0.0
    %152 = vmatprep.subr.mxu0 0.0
    %153 = vmatpush1.msra.mxu0 0.0
    %154 = vmatprep.subr.mxu0 0.0
    %155 = vmatpush1.msra.mxu0 0.0
    %156 = vmatprep.subr.mxu0 0.0
    %157 = vmatpush1.msra.mxu0 0.0
    %158 = vmatprep.subr.mxu0 0.0
    %159 = vmatpush1.msra.mxu0 0.0
    %160 = vmatprep.subr.mxu0 0.0
    %161 = vmatpush1.msra.mxu0 0.0
    %162 = vmatprep.subr.mxu0 0.0
    %163 = vmatpush1.msra.mxu0 0.0
    %164 = vmatprep.subr.mxu0 0.0
    %165 = vmatpush1.msra.mxu0 0.0
    %166 = vmatprep.subr.mxu0 0.0
    %167 = vmatpush1.msra.mxu0 0.0
    %168 = vmatprep.subr.mxu0 0.0
    %169 = vmatpush1.msra.mxu0 0.0
    %170 = vmatprep.subr.mxu0 0.0
    %171 = vmatpush1.msra.mxu0 0.0
    %172 = vmatprep.subr.mxu0 0.0
    %173 = vmatpush1.msra.mxu0 0.0
    %174 = vmatprep.subr.mxu0 0.0
    %175 = vmatpush1.msra.mxu0 0.0
    %176 = vmatprep.subr.mxu0 0.0
    %177 = vmatpush1.msra.mxu0 0.0
    %178 = vmatprep.subr.mxu0 0.0
    %179 = vmatpush1.msra.mxu0 0.0
    %180 = vmatprep.subr.mxu0 0.0
    %181 = vmatpush1.msra.mxu0 0.0
    %182 = vmatprep.subr.mxu0 0.0
    %183 = vmatpush1.msra.mxu0 0.0
    %184 = vmatprep.subr.mxu0 0.0
    %185 = vmatpush1.msra.mxu0 0.0
    %186 = vmatprep.mubr.f32.mxu0 0.0
    %187 = vmatmul.mubr.f32.gmra.mrb[0].mxu0 %v113
    %v188 = vpop.f32.mrb[0].mxu0
    %v189 = vadd.f32 0.0, %v188
    %v190 = vpop.f32.mrb[0].mxu0
    %v191 = vadd.f32 0.0, %v190
    %192 = vdwg.mxu0
    %v193 = vmul.f32 %v189, %v105
    %v194 = vmul.f32 %v191, %v107
    %v195 = vld [vmem:[%s5] sm:$0xff]
    %v196 = vld [vmem:[%s5 + $0x8] sm:$0xff]
    %v197 = vld [vmem:[%s5 + $0x10] sm:$0xff]
    %v198 = vld [vmem:[%s5 + $0x18] sm:$0xff]
    %v199 = vld [vmem:[%s5 + $0x20] sm:$0xff]
    %v200 = vld [vmem:[%s5 + $0x28] sm:$0xff]
    %v201 = vld [vmem:[%s5 + $0x30] sm:$0xff]
    %v202 = vld [vmem:[%s5 + $0x38] sm:$0xff]
    %v203 = vld [vmem:[%s5 + $0x40] sm:$0xff]
    %v204 = vld [vmem:[%s5 + $0x48] sm:$0xff]
    %v205 = vld [vmem:[%s5 + $0x50] sm:$0xff]
    %v206 = vld [vmem:[%s5 + $0x58] sm:$0xff]
    %v207 = vld [vmem:[%s5 + $0x60] sm:$0xff]
    %v208 = vld [vmem:[%s5 + $0x68] sm:$0xff]
    %v209 = vld [vmem:[%s5 + $0x70] sm:$0xff]
    %v210 = vld [vmem:[%s5 + $0x78] sm:$0xff]
    %v211 = vld [vmem:[%s5 + $0x80] sm:$0xff]
    %v212 = vld [vmem:[%s5 + $0x88] sm:$0xff]
    %v213 = vld [vmem:[%s5 + $0x90] sm:$0xff]
    %v214 = vld [vmem:[%s5 + $0x98] sm:$0xff]
    %v215 = vld [vmem:[%s5 + $0xa0] sm:$0xff]
    %v216 = vld [vmem:[%s5 + $0xa8] sm:$0xff]
    %v217 = vld [vmem:[%s5 + $0xb0] sm:$0xff]
    %v218 = vld [vmem:[%s5 + $0xb8] sm:$0xff]
    %v219 = vld [vmem:[%s3] sm:$0x3f]
    %v221 = vsel %vm115, %v219, 0
    %223 = vmatprep.subr.mxu0 0.0
    %224 = vmatpush1.msra.mxu0 %v221
    %225 = vmatprep.subr.mxu0 0.0
    %226 = vmatpush1.msra.mxu0 0.0
    %227 = vmatprep.subr.mxu0 0.0
    %228 = vmatpush1.msra.mxu0 0.0
    %229 = vmatprep.subr.mxu0 0.0
    %230 = vmatpush1.msra.mxu0 0.0
    %231 = vmatprep.subr.mxu0 0.0
    %232 = vmatpush1.msra.mxu0 0.0
    %233 = vmatprep.subr.mxu0 0.0
    %234 = vmatpush1.msra.mxu0 0.0
    %235 = vmatprep.subr.mxu0 0.0
    %236 = vmatpush1.msra.mxu0 0.0
    %237 = vmatprep.subr.mxu0 0.0
    %238 = vmatpush1.msra.mxu0 0.0
    %239 = vmatprep.subr.mxu0 0.0
    %240 = vmatpush1.msra.mxu0 0.0
    %241 = vmatprep.subr.mxu0 0.0
    %242 = vmatpush1.msra.mxu0 0.0
    %243 = vmatprep.subr.mxu0 0.0
    %244 = vmatpush1.msra.mxu0 0.0
    %245 = vmatprep.subr.mxu0 0.0
    %246 = vmatpush1.msra.mxu0 0.0
    %247 = vmatprep.subr.mxu0 0.0
    %248 = vmatpush1.msra.mxu0 0.0
    %249 = vmatprep.subr.mxu0 0.0
    %250 = vmatpush1.msra.mxu0 0.0
    %251 = vmatprep.subr.mxu0 0.0
    %252 = vmatpush1.msra.mxu0 0.0
    %253 = vmatprep.subr.mxu0 0.0
    %254 = vmatpush1.msra.mxu0 0.0
    %255 = vmatprep.subr.mxu0 0.0
    %256 = vmatpush1.msra.mxu0 0.0
    %257 = vmatprep.subr.mxu0 0.0
    %258 = vmatpush1.msra.mxu0 0.0
    %259 = vmatprep.subr.mxu0 0.0
    %260 = vmatpush1.msra.mxu0 0.0
    %261 = vmatprep.subr.mxu0 0.0
    %262 = vmatpush1.msra.mxu0 0.0
    %263 = vmatprep.subr.mxu0 0.0
    %264 = vmatpush1.msra.mxu0 0.0
    %265 = vmatprep.subr.mxu0 0.0
    %266 = vmatpush1.msra.mxu0 0.0
    %267 = vmatprep.subr.mxu0 0.0
    %268 = vmatpush1.msra.mxu0 0.0
    %269 = vmatprep.subr.mxu0 0.0
    %270 = vmatpush1.msra.mxu0 0.0
    %271 = vmatprep.subr.mxu0 0.0
    %272 = vmatpush1.msra.mxu0 0.0
    %273 = vmatprep.subr.mxu0 0.0
    %274 = vmatpush1.msra.mxu0 0.0
    %275 = vmatprep.subr.mxu0 0.0
    %276 = vmatpush1.msra.mxu0 0.0
    %277 = vmatprep.subr.mxu0 0.0
    %278 = vmatpush1.msra.mxu0 0.0
    %279 = vmatprep.subr.mxu0 0.0
    %280 = vmatpush1.msra.mxu0 0.0
    %281 = vmatprep.subr.mxu0 0.0
    %282 = vmatpush1.msra.mxu0 0.0
    %283 = vmatprep.subr.mxu0 0.0
    %284 = vmatpush1.msra.mxu0 0.0
    %285 = vmatprep.subr.mxu0 0.0
    %286 = vmatpush1.msra.mxu0 0.0
    %287 = vmatprep.mubr.f32.mxu0 0.0
    %288 = vmatmul.mubr.f32.gmra.mrb[0].mxu0 %v113
    %v289 = vpop.f32.mrb[0].mxu0
    %v290 = vadd.f32 0.0, %v289
    %v291 = vpop.f32.mrb[0].mxu0
    %292 = vdwg.mxu0
    %vm293 = vcmask 523264
    %v295 = vsel %vm293, %v194, 0
    %297 = vmatprep.subr.mxu0 0.0
    %298 = vmatpush1.msra.mxu0 %v195
    %299 = vmatprep.subr.mxu0 0.0
    %300 = vmatpush1.msra.mxu0 %v196
    %301 = vmatprep.subr.mxu0 0.0
    %302 = vmatpush1.msra.mxu0 %v197
    %303 = vmatprep.subr.mxu0 0.0
    %304 = vmatpush1.msra.mxu0 %v198
    %305 = vmatprep.subr.mxu0 0.0
    %306 = vmatpush1.msra.mxu0 %v199
    %307 = vmatprep.subr.mxu0 0.0
    %308 = vmatpush1.msra.mxu0 %v200
    %309 = vmatprep.subr.mxu0 0.0
    %310 = vmatpush1.msra.mxu0 %v201
    %311 = vmatprep.subr.mxu0 0.0
    %312 = vmatpush1.msra.mxu0 %v202
    %313 = vmatprep.subr.mxu0 0.0
    %314 = vmatpush1.msra.mxu0 %v203
    %315 = vmatprep.subr.mxu0 0.0
    %316 = vmatpush1.msra.mxu0 %v204
    %317 = vmatprep.subr.mxu0 0.0
    %318 = vmatpush1.msra.mxu0 %v205
    %319 = vmatprep.subr.mxu0 0.0
    %320 = vmatpush1.msra.mxu0 %v206
    %321 = vmatprep.subr.mxu0 0.0
    %322 = vmatpush1.msra.mxu0 %v207
    %323 = vmatprep.subr.mxu0 0.0
    %324 = vmatpush1.msra.mxu0 %v208
    %325 = vmatprep.subr.mxu0 0.0
    %326 = vmatpush1.msra.mxu0 %v209
    %327 = vmatprep.subr.mxu0 0.0
    %328 = vmatpush1.msra.mxu0 %v210
    %329 = vmatprep.subr.mxu0 0.0
    %330 = vmatpush1.msra.mxu0 %v211
    %331 = vmatprep.subr.mxu0 0.0
    %332 = vmatpush1.msra.mxu0 %v212
    %333 = vmatprep.subr.mxu0 0.0
    %334 = vmatpush1.msra.mxu0 %v213
    %335 = vmatprep.subr.mxu0 0.0
    %336 = vmatpush1.msra.mxu0 %v214
    %337 = vmatprep.subr.mxu0 0.0
    %338 = vmatpush1.msra.mxu0 %v215
    %339 = vmatprep.subr.mxu0 0.0
    %340 = vmatpush1.msra.mxu0 %v216
    %341 = vmatprep.subr.mxu0 0.0
    %342 = vmatpush1.msra.mxu0 %v217
    %343 = vmatprep.subr.mxu0 0.0
    %344 = vmatpush1.msra.mxu0 %v218
    %345 = vmatprep.subr.mxu0 0.0
    %346 = vmatpush1.msra.mxu0 0.0
    %347 = vmatprep.subr.mxu0 0.0
    %348 = vmatpush1.msra.mxu0 0.0
    %349 = vmatprep.subr.mxu0 0.0
    %350 = vmatpush1.msra.mxu0 0.0
    %351 = vmatprep.subr.mxu0 0.0
    %352 = vmatpush1.msra.mxu0 0.0
    %353 = vmatprep.subr.mxu0 0.0
    %354 = vmatpush1.msra.mxu0 0.0
    %355 = vmatprep.subr.mxu0 0.0
    %356 = vmatpush1.msra.mxu0 0.0
    %357 = vmatprep.subr.mxu0 0.0
    %358 = vmatpush1.msra.mxu0 0.0
    %359 = vmatprep.subr.mxu0 0.0
    %360 = vmatpush1.msra.mxu0 0.0
    %361 = vmatprep.mubr.f32.mxu0 %v295
    %362 = vmatmul.mubr.f32.gmra.mrb[0].mxu0 %v193
    %v363 = vpop.f32.mrb[0].mxu0
    %v364 = vadd.f32 %v290, %v363
    %v365 = vpop.f32.mrb[0].mxu0
    %366 = vdwg.mxu0
    %v367 = vlaneseq
    %v368 = vand.u32 %v367, 127
    %v369 = vmax.f32 %v364, 0.0
    %vm370 = vcmp.ne.f32.partialorder %v364, %v364
    %v371 = vadd.f32 %v364, 0.0
    %v372 = vand.u32 2147483647, %v364
    %v373 = vsub.f32 0.0, %v372
    %v374 = vmul.f32 %v373, 1.442695
    %v375 = vpow.pop %v374
    %v376 = vadd.f32 %v375, 1.0
    %v377 = vlog2.pop %v376
    %v378 = vmul.f32 %v377, 0.6931472
    %v379 = vmul.f32 -0.5, %v375
    %v380 = vadd.f32 %v379, 1.0
    %v381 = vmul.f32 %v380, %v375
    %v382 = vand.u32 2147483647, %v375
    %vm383 = vcmp.lt.f32.partialorder %v382, 0.0004427343
    %v384 = vsel %vm383, %v381, %v378
    %v385 = vadd.f32 %v369, %v384
    %v386 = vsel %vm370, %v371, %v385
    %v387 = vrsqrt.pop %v386
    %v388 = vmul.f32 %v386, %v387
    %vm389 = vcmp.eq.f32.partialorder %v386, inf
    %v390 = vsel %vm389, %v386, %v388
    %vm391 = vcmp.eq.f32.partialorder %v386, 0.0
    %v392 = vand.u32 %v386, 2147483648
    %v393 = vsel %vm391, %v392, %v390
    %vm394 = vcmp.lt.s32.totalorder %v368, 16
    %v395 = vsel %vm394, %v364, %v393
    %396 = vst.msk [vmem:[#allocation2] sm:$0xff] %vm34, %v395
    // Predicated region
    $region26: #{tpu_custom_call.1} parent=1 // pred_check
      _
    $region27: #{tpu_custom_call.1} parent=1 // pred_check_branch
      %398 = sbr.rel (0) target = $region29
    $region28: #{tpu_custom_call.1} parent=1 // pred_region
      %s400 = ssub.s32 128, 128
      %401 = vsyncadd [#allocation3], %s400
      %s403 = sshll.u32 [#allocation2], 4
      %s404 = int_to_ptr.vmem [resolvable:$true] %s403
      %406 = dma.vmem_to_hbm [thread:$0]  %s404, 128, %s6, [#allocation3]
    $region29: #{tpu_custom_call.1} parent=1 // pred_fallthru
      _
    // Predicated region
    $region30: #{tpu_custom_call.1} parent=1 // pred_check
      _
    $region31: #{tpu_custom_call.1} parent=1 // pred_check_branch
      %408 = sbr.rel (0) target = $region33
    $region32: #{tpu_custom_call.1} parent=1 // pred_region
      %409 = dma.done [#allocation3], 128
    $region33: #{tpu_custom_call.1} parent=1 // pred_fallthru
      _
    %410 = vsyncpa [#allocation3], 1

</llo_original>
